<compile_context>
chip_gen: v6e
topology: v6e:2x2x1
jax: 0.10.0
libtpu: 0.0.40
codegen_flags: <defaults>
</compile_context>

<pallas_src>
import functools

import jax
import jax.numpy as jnp
from jax.experimental import pallas as pl
from jax.experimental.pallas import tpu as pltpu


def _offset_softmax_kernel(x_ref, o_ref, *, offset):
    # x_ref / o_ref: (TB, F) tile; softmax along the lane (last) axis.
    x = x_ref[...].astype(jnp.float32)
    m = jnp.max(x, axis=-1, keepdims=True)          # XLU row reduction
    e = jnp.exp(x - m)                              # EUP
    s = jnp.sum(e, axis=-1, keepdims=True)          # XLU row reduction
    y = e / s
    y = jnp.maximum(y - offset, 0.0)                # offset-ReLU (VPU)
    o_ref[...] = y.astype(o_ref.dtype)


def _offset_softmax_2d(x, offset, *, block_rows=128):
    """softmax along the last axis of a 2-D array, then max(0, . - offset)."""
    B, F = x.shape
    # Row tile: full extent if it fits in one block, else a multiple of 8.
    TB = B if B <= block_rows else block_rows
    grid = (pl.cdiv(B, TB),)

    elem_bytes = jnp.dtype(x.dtype).itemsize
    cost = pl.CostEstimate(
        flops=5 * B * F,                 # sub, sub-max, div, sub-offset, max
        transcendentals=B * F,           # exp
        bytes_accessed=2 * B * F * elem_bytes,
    )

    return pl.pallas_call(
        functools.partial(_offset_softmax_kernel, offset=float(offset)),
        out_shape=jax.ShapeDtypeStruct((B, F), x.dtype),
        grid=grid,
        in_specs=[pl.BlockSpec((TB, F), lambda i: (i, 0))],
        out_specs=pl.BlockSpec((TB, F), lambda i: (i, 0)),
        compiler_params=pltpu.CompilerParams(
            dimension_semantics=("parallel",),
        ),
        cost_estimate=cost,
    )(x)


def offset_softmax(x, offset, *, block_rows=128):
    """OffsetSoftmax.forward: y = softmax(x, dim=1); y = max(0, y - offset)."""
    if x.ndim == 2:
        # dim=1 is already the last (lane-major) axis -> no relayout needed.
        return _offset_softmax_2d(x, offset, block_rows=block_rows)
    # Rank > 2: move the softmax axis (dim=1) to the lanes, flatten rows.
    xm = jnp.moveaxis(x, 1, -1)
    lead = xm.shape[:-1]
    C = xm.shape[-1]
    y = _offset_softmax_2d(xm.reshape(-1, C), offset, block_rows=block_rows)
    return jnp.moveaxis(y.reshape(*lead, C), -1, 1)


def _reference(x, offset):
    # Pure-JAX reference of the PyTorch forward.
    y = jax.nn.softmax(x, axis=1)
    return jnp.maximum(y - offset, 0.0)


if __name__ == "__main__":
    # TODO(synk): debugPrintActivationOutput debug prints (undefined module-level
    # global in the source) are not reproduced.
    offset = 0.1
    key = jax.random.PRNGKey(0)
    k1, k2 = jax.random.split(key)

    # 2-D activation (batch, features): softmax over dim=1 == last axis.
    # 256 rows / TB=128 exercises the tiled grid; F=128 keeps stores lane-dense.
    x2 = jax.random.normal(k1, (256, 128), dtype=jnp.float32)
    out2 = jax.block_until_ready(offset_softmax(x2, offset))
    ref2 = _reference(x2, offset)
    assert out2.shape == x2.shape
    assert jnp.allclose(out2, ref2, atol=1e-6, rtol=1e-6)

    # Rank-3 input (batch, channels, length): softmax over channels (dim=1).
    x3 = jax.random.normal(k2, (2, 4, 16), dtype=jnp.float32)
    out3 = jax.block_until_ready(offset_softmax(x3, offset))
    ref3 = _reference(x3, offset)
    assert out3.shape == x3.shape
    assert jnp.allclose(out3, ref3, atol=1e-6, rtol=1e-6)

    print("KERNEL_OK")
</pallas_src>

<mosaic_0001>
module attributes {stable_mosaic.version = 11 : i64} {
  func.func @_offset_softmax_kernel(%arg0: i32, %arg1: memref<128x128xf32, #tpu.memory_space<vmem>>, %arg2: memref<128x128xf32, #tpu.memory_space<vmem>>) attributes {dimension_semantics = [#tpu.dimension_semantics<parallel>], iteration_bounds = array<i64: 2>, scalar_prefetch = 0 : i64, scratch_operands = 0 : i64, tpu.core_type = #tpu.core_type<tc>, window_params = [{transform_indices = @transform_0, window_bounds = array<i64: 128, 128>}, {transform_indices = @transform_1, window_bounds = array<i64: 128, 128>}]} {
    %c0 = arith.constant 0 : index
    %c0_0 = arith.constant 0 : index
    %0 = vector.load %arg1[%c0, %c0_0] : memref<128x128xf32, #tpu.memory_space<vmem>>, vector<128x128xf32>
    %cst = arith.constant dense<0xFF800000> : vector<128xf32>
    %1 = vector.multi_reduction <maximumf>, %0, %cst [1] : vector<128x128xf32> to vector<128xf32>
    %2 = vector.shape_cast %1 : vector<128xf32> to vector<128x1xf32>
    %3 = vector.broadcast %2 : vector<128x1xf32> to vector<128x128xf32>
    %4 = arith.subf %0, %3 : vector<128x128xf32>
    %5 = math.exp %4 : vector<128x128xf32>
    %cst_1 = arith.constant dense<0.000000e+00> : vector<128xf32>
    %6 = vector.multi_reduction <add>, %5, %cst_1 [1] : vector<128x128xf32> to vector<128xf32>
    %7 = vector.shape_cast %6 : vector<128xf32> to vector<128x1xf32>
    %8 = vector.broadcast %7 : vector<128x1xf32> to vector<128x128xf32>
    %9 = arith.divf %5, %8 : vector<128x128xf32>
    %cst_2 = arith.constant 1.000000e-01 : f32
    %10 = vector.broadcast %cst_2 : f32 to vector<128x128xf32>
    %11 = arith.subf %9, %10 : vector<128x128xf32>
    %cst_3 = arith.constant 0.000000e+00 : f32
    %12 = vector.broadcast %cst_3 : f32 to vector<128x128xf32>
    %13 = arith.maximumf %11, %12 : vector<128x128xf32>
    %c0_4 = arith.constant 0 : index
    %c0_5 = arith.constant 0 : index
    %14 = vector.load %arg2[%c0_4, %c0_5] : memref<128x128xf32, #tpu.memory_space<vmem>>, vector<128x128xf32>
    tpu.vector_store %arg2[%c0_4, %c0_5], %13 {strides = array<i32>} : memref<128x128xf32, #tpu.memory_space<vmem>>, vector<128x128xf32>,
    return
  }
  func.func @transform_0(%arg0: i32) -> (i32, i32) {
    %c0_i32 = arith.constant 0 : i32
    %c0_i32_0 = arith.constant 0 : i32
    return %arg0, %c0_i32 : i32, i32
  }
  func.func @transform_1(%arg0: i32) -> (i32, i32) {
    %c0_i32 = arith.constant 0 : i32
    %c0_i32_0 = arith.constant 0 : i32
    return %arg0, %c0_i32 : i32, i32
  }
}

</mosaic_0001>

<llo_original>
// kernel: tpu_custom_call.1
$region0: #{tpu_custom_call.1}
  #allocation0 [shape = 'u32[]', space=smem, size = 0x4, offset = 0x4, fixed_abs, tag = 'smem constant byte address 0x4 - core index']
  #allocation1 [shape = 'u32[144,128]{1,0:T(1,128)}', space=vmem, size = 0x12000, scoped, tag = 'internal scratch']
  %s0 = inlined_call_operand.hbm [shape: f32[256,128], index: 0, kind: input, shape index: {}]
  %s1 = inlined_call_operand.hbm [shape: f32[256,128], index: 1, kind: output, shape index: {}]
  %s2 = sld [smem:[#allocation0]]
  $region41: #{tpu_custom_call.1} parent=0
    _
  %s4 = ssub.s32 1, %s2
  %s5 = scalar_select 0, %s4, %s2
  $region1: #{tpu_custom_call.1} parent=0
    #allocation2 [shape = 'u8[131072]{0}', space=vmem, size = 0x20000, scoped, tag = 'input window, operand 0']
    #allocation3 [shape = 's32[2]{0}', space=sflag, size = 0x8, scoped, tag = 'scoped memory for tpu_custom_call.1']
    #allocation4 [shape = 's32[2]{0}', space=sflag, size = 0x8, scoped, tag = 'scoped memory for tpu_custom_call.1']
    #allocation5 [shape = 'u8[131072]{0}', space=vmem, size = 0x20000, scoped, tag = 'output window, operand 0']
    %6 = vsyncpa [#allocation3], 0
    %s7 = scalar_lea.sflag [#allocation3], 1
    %8 = vsyncpa %s7, 0
    %9 = vsyncpa [#allocation4], 0
    %s10 = scalar_lea.sflag [#allocation4], 1
    %11 = vsyncpa %s10, 0
    loop: start=0, step=1, limit=4
    $region2: #{tpu_custom_call.1} parent=1 // loop_pre_header
      _
    $region3: #{tpu_custom_call.1} parent=1 // loop_header
      %s13 = sphi 0, %s17
      %p14 = scmp.ge.s32.totalorder %s13, 4
      %s23 = sphi 0, %s25
      %s26 = sphi 0, %s23
      %s27 = sphi 0, %s26
      %s43 = sphi 0, %s27
      %s49 = sphi 0, %s51
      %s52 = sphi 0, %s49
      %s53 = sphi 0, %s52
      %s69 = sphi 0, %s53
    $region4: #{tpu_custom_call.1} parent=1 // loop_header_branch
      %16 = sbr.rel (%p14) target = $region8
    $region5: #{tpu_custom_call.1} parent=1 // loop_body
      %s18 = ssub.s32 %s13, 1
      %s19 = ssub.s32 %s13, 2
      %s20 = sadd.s32 %s13, 1
      %s21 = ssub.s32 %s13, %s20
      %p22 = scmp.eq.s32.totalorder %s21, 0
      %s24 = sadd.s32 %s23, 1
      %s25 = scalar_select %p22, %s23, %s24
      %p28 = pneg %p22
      %p29 = scmp.eq.s32.totalorder %s13, 1
      %p30 = por %p28, %p29
      %p31 = scmp.ne.s32.totalorder %s23, %s26
      %p32 = scmp.eq.s32.totalorder %s13, 0
      %p33 = por %p31, %p32
      %p34 = scmp.ne.s32.totalorder %s23, %s26
      %p35 = scmp.eq.s32.totalorder %s18, 1
      %p36 = por %p34, %p35
      %p37 = scmp.ne.s32.totalorder %s26, %s27
      %p38 = scmp.eq.s32.totalorder %s18, 0
      %p39 = por %p37, %p38
      %p40 = scmp.ne.s32.totalorder %s26, %s27
      %p41 = scmp.eq.s32.totalorder %s19, 1
      %p42 = por %p40, %p41
      %p44 = scmp.ne.s32.totalorder %s27, %s43
      %p45 = scmp.eq.s32.totalorder %s19, 0
      %p46 = por %p44, %p45
      %s47 = ssub.s32 %s13, %s20
      %p48 = scmp.eq.s32.totalorder %s47, 0
      %s50 = sadd.s32 %s49, 1
      %s51 = scalar_select %p48, %s49, %s50
      %p54 = pneg %p48
      %p55 = scmp.eq.s32.totalorder %s13, 1
      %p56 = por %p54, %p55
      %p57 = scmp.ne.s32.totalorder %s49, %s52
      %p58 = scmp.eq.s32.totalorder %s13, 0
      %p59 = por %p57, %p58
      %p60 = scmp.ne.s32.totalorder %s49, %s52
      %p61 = scmp.eq.s32.totalorder %s18, 1
      %p62 = por %p60, %p61
      %p63 = scmp.ne.s32.totalorder %s52, %s53
      %p64 = scmp.eq.s32.totalorder %s18, 0
      %p65 = por %p63, %p64
      %p66 = scmp.ne.s32.totalorder %s52, %s53
      %p67 = scmp.eq.s32.totalorder %s19, 1
      %p68 = por %p66, %p67
      %p70 = scmp.ne.s32.totalorder %s53, %s69
      %p71 = scmp.eq.s32.totalorder %s19, 0
      %p72 = por %p70, %p71
      %p73 = scmp.le.s32.totalorder 1, %s13
      %p74 = scmp.lt.s32.totalorder %s13, 3
      %p75 = pnand %p73, %p74
      %p76 = pneg %p75
      // Predicated region
      $region9: #{tpu_custom_call.1} parent=5 // pred_check
        _
      $region10: #{tpu_custom_call.1} parent=5 // pred_check_branch
        %78 = sbr.rel (%p75) target = $region12
      $region11: #{tpu_custom_call.1} parent=5 // pred_region
        %s79 = ssub.s32 %s13, 1
      $region12: #{tpu_custom_call.1} parent=5 // pred_fallthru
        _
      %p80 = scmp.lt.s32.totalorder %s13, 2
      // Predicated region
      $region13: #{tpu_custom_call.1} parent=5 // pred_check
        %p81 = pneg %p80
      $region14: #{tpu_custom_call.1} parent=5 // pred_check_branch
        %83 = sbr.rel (%p81) target = $region16
      $region15: #{tpu_custom_call.1} parent=5 // pred_region
        // Predicated region
        $region17: #{tpu_custom_call.1} parent=15 // pred_check
          %p84 = pneg %p33
        $region18: #{tpu_custom_call.1} parent=15 // pred_check_branch
          %86 = sbr.rel (%p84) target = $region20
        $region19: #{tpu_custom_call.1} parent=15 // pred_region
          %s87 = sand.u32 %s23, 1
          %s88 = scalar_lea.sflag [#allocation3], %s87
          %s89 = sand.u32 %s23, 1
          %s90 = smul.addr %s89, 128
          %s91 = scalar_lea.vmem [#allocation2], %s90
          %s92 = smul.u32 16, %s13
          %s94 = ssub.s32 2048, 2048
          %95 = vsyncadd %s88, %s94
          %s96 = smul.addr %s92, 128
          %s97 = scalar_lea.hbm %s0, %s96
          %s98 = sshll.u32 %s91, 4
          %s99 = int_to_ptr.vmem [resolvable:$true] %s98
          %104 = dma.hbm_to_vmem [thread:$0]  %s97, 2048, %s99, %s88, 128, 128, 8
        $region20: #{tpu_custom_call.1} parent=15 // pred_fallthru
          _
      $region16: #{tpu_custom_call.1} parent=5 // pred_fallthru
        _
      %p105 = scmp.le.s32.totalorder 1, %s13
      %p106 = scmp.lt.s32.totalorder %s13, 3
      %p107 = pnand %p105, %p106
      %p108 = pneg %p107
      // Predicated region
      $region21: #{tpu_custom_call.1} parent=5 // pred_check
        _
      $region22: #{tpu_custom_call.1} parent=5 // pred_check_branch
        %110 = sbr.rel (%p107) target = $region24
      $region23: #{tpu_custom_call.1} parent=5 // pred_region
        %s111 = ssub.s32 %s13, 1
        %s112 = sand.u32 %s26, 1
        %s113 = scalar_lea.sflag [#allocation3], %s112
        %s114 = sand.u32 %s26, 1
        %s115 = smul.addr %s114, 128
        %s116 = scalar_lea.vmem [#allocation2], %s115
        // Predicated region
        $region25: #{tpu_custom_call.1} parent=23 // pred_check
          %p117 = pneg %p39
        $region26: #{tpu_custom_call.1} parent=23 // pred_check_branch
          %119 = sbr.rel (%p117) target = $region28
        $region27: #{tpu_custom_call.1} parent=23 // pred_region
          %120 = dma.done %s113, 2048
        $region28: #{tpu_custom_call.1} parent=23 // pred_fallthru
          _
        %s121 = sand.u32 %s26, 1
        %s122 = scalar_lea.sflag [#allocation3], %s121
        %s123 = sand.u32 %s26, 1
        %s124 = smul.addr %s123, 128
        %s125 = scalar_lea.vmem [#allocation2], %s124
        %p126 = pneg %p39
        %p127 = pneg %p36
        %p128 = pneg %p65
        %p129 = pneg %p62
        %s130 = sand.u32 %s52, 1
        %s131 = scalar_lea.sflag [#allocation4], %s130
        %s132 = sand.u32 %s52, 1
        %s133 = smul.addr %s132, 128
        %s134 = scalar_lea.vmem [#allocation5], %s133
        %s135 = smul.u32 16, %s18
        %s136 = smul.u32 16, %s18
        %v137 = vld [vmem:[%s116] sm:$0xff]
        %v138 = vld [vmem:[%s116 + $0x8] sm:$0xff]
        %v139 = vld [vmem:[%s116 + $0x10] sm:$0xff]
        %v140 = vld [vmem:[%s116 + $0x18] sm:$0xff]
        %v141 = vld [vmem:[%s116 + $0x20] sm:$0xff]
        %v142 = vld [vmem:[%s116 + $0x28] sm:$0xff]
        %v143 = vld [vmem:[%s116 + $0x30] sm:$0xff]
        %v144 = vld [vmem:[%s116 + $0x38] sm:$0xff]
        %v145 = vld [vmem:[%s116 + $0x40] sm:$0xff]
        %v146 = vld [vmem:[%s116 + $0x48] sm:$0xff]
        %v147 = vld [vmem:[%s116 + $0x50] sm:$0xff]
        %v148 = vld [vmem:[%s116 + $0x58] sm:$0xff]
        %v149 = vld [vmem:[%s116 + $0x60] sm:$0xff]
        %v150 = vld [vmem:[%s116 + $0x68] sm:$0xff]
        %v151 = vld [vmem:[%s116 + $0x70] sm:$0xff]
        %v152 = vld [vmem:[%s116 + $0x78] sm:$0xff]
        %153 = vmax.xlane.f32.xlu0 %v137
        %v154 = vpop.xlane.xlu0 %153
        %155 = vmax.xlane.f32.xlu0 %v138
        %v156 = vpop.xlane.xlu0 %155
        %157 = vmax.xlane.f32.xlu0 %v139
        %v158 = vpop.xlane.xlu0 %157
        %159 = vmax.xlane.f32.xlu0 %v140
        %v160 = vpop.xlane.xlu0 %159
        %161 = vmax.xlane.f32.xlu0 %v141
        %v162 = vpop.xlane.xlu0 %161
        %163 = vmax.xlane.f32.xlu0 %v142
        %v164 = vpop.xlane.xlu0 %163
        %165 = vmax.xlane.f32.xlu0 %v143
        %v166 = vpop.xlane.xlu0 %165
        %167 = vmax.xlane.f32.xlu0 %v144
        %v168 = vpop.xlane.xlu0 %167
        %169 = vmax.xlane.f32.xlu0 %v145
        %v170 = vpop.xlane.xlu0 %169
        %171 = vmax.xlane.f32.xlu0 %v146
        %v172 = vpop.xlane.xlu0 %171
        %173 = vmax.xlane.f32.xlu0 %v147
        %v174 = vpop.xlane.xlu0 %173
        %175 = vmax.xlane.f32.xlu0 %v148
        %v176 = vpop.xlane.xlu0 %175
        %177 = vmax.xlane.f32.xlu0 %v149
        %v178 = vpop.xlane.xlu0 %177
        %179 = vmax.xlane.f32.xlu0 %v150
        %v180 = vpop.xlane.xlu0 %179
        %181 = vmax.xlane.f32.xlu0 %v151
        %v182 = vpop.xlane.xlu0 %181
        %183 = vmax.xlane.f32.xlu0 %v152
        %v184 = vpop.xlane.xlu0 %183
        %v185 = vsub.f32 %v137, %v154
        %v186 = vsub.f32 %v138, %v156
        %v187 = vsub.f32 %v139, %v158
        %v188 = vsub.f32 %v140, %v160
        %v189 = vsub.f32 %v141, %v162
        %v190 = vsub.f32 %v142, %v164
        %v191 = vsub.f32 %v143, %v166
        %v192 = vsub.f32 %v144, %v168
        %v193 = vsub.f32 %v145, %v170
        %v194 = vsub.f32 %v146, %v172
        %v195 = vsub.f32 %v147, %v174
        %v196 = vsub.f32 %v148, %v176
        %v197 = vsub.f32 %v149, %v178
        %v198 = vsub.f32 %v150, %v180
        %v199 = vsub.f32 %v151, %v182
        %v200 = vsub.f32 %v152, %v184
        %v201 = vmul.f32 %v185, 1.442695
        %v202 = vpow.pop %v201
        %v203 = vmul.f32 %v186, 1.442695
        %v204 = vpow.pop %v203
        %v205 = vmul.f32 %v187, 1.442695
        %v206 = vpow.pop %v205
        %v207 = vmul.f32 %v188, 1.442695
        %v208 = vpow.pop %v207
        %v209 = vmul.f32 %v189, 1.442695
        %v210 = vpow.pop %v209
        %v211 = vmul.f32 %v190, 1.442695
        %v212 = vpow.pop %v211
        %v213 = vmul.f32 %v191, 1.442695
        %v214 = vpow.pop %v213
        %v215 = vmul.f32 %v192, 1.442695
        %v216 = vpow.pop %v215
        %v217 = vmul.f32 %v193, 1.442695
        %v218 = vpow.pop %v217
        %v219 = vmul.f32 %v194, 1.442695
        %v220 = vpow.pop %v219
        %v221 = vmul.f32 %v195, 1.442695
        %v222 = vpow.pop %v221
        %v223 = vmul.f32 %v196, 1.442695
        %v224 = vpow.pop %v223
        %v225 = vmul.f32 %v197, 1.442695
        %v226 = vpow.pop %v225
        %v227 = vmul.f32 %v198, 1.442695
        %v228 = vpow.pop %v227
        %v229 = vmul.f32 %v199, 1.442695
        %v230 = vpow.pop %v229
        %v231 = vmul.f32 %v200, 1.442695
        %v232 = vpow.pop %v231
        %233 = vadd.xlane.f32.xlu0 %v202
        %v234 = vpop.xlane.xlu0 %233
        %235 = vadd.xlane.f32.xlu0 %v204
        %v236 = vpop.xlane.xlu0 %235
        %237 = vadd.xlane.f32.xlu0 %v206
        %v238 = vpop.xlane.xlu0 %237
        %239 = vadd.xlane.f32.xlu0 %v208
        %v240 = vpop.xlane.xlu0 %239
        %241 = vadd.xlane.f32.xlu0 %v210
        %v242 = vpop.xlane.xlu0 %241
        %243 = vadd.xlane.f32.xlu0 %v212
        %v244 = vpop.xlane.xlu0 %243
        %245 = vadd.xlane.f32.xlu0 %v214
        %v246 = vpop.xlane.xlu0 %245
        %247 = vadd.xlane.f32.xlu0 %v216
        %v248 = vpop.xlane.xlu0 %247
        %249 = vadd.xlane.f32.xlu0 %v218
        %v250 = vpop.xlane.xlu0 %249
        %251 = vadd.xlane.f32.xlu0 %v220
        %v252 = vpop.xlane.xlu0 %251
        %253 = vadd.xlane.f32.xlu0 %v222
        %v254 = vpop.xlane.xlu0 %253
        %255 = vadd.xlane.f32.xlu0 %v224
        %v256 = vpop.xlane.xlu0 %255
        %257 = vadd.xlane.f32.xlu0 %v226
        %v258 = vpop.xlane.xlu0 %257
        %259 = vadd.xlane.f32.xlu0 %v228
        %v260 = vpop.xlane.xlu0 %259
        %261 = vadd.xlane.f32.xlu0 %v230
        %v262 = vpop.xlane.xlu0 %261
        %263 = vadd.xlane.f32.xlu0 %v232
        %v264 = vpop.xlane.xlu0 %263
        %v265 = vrcp.pop %v234
        %v266 = vmul.f32 %v202, %v265
        %v267 = vrcp.pop %v236
        %v268 = vmul.f32 %v204, %v267
        %v269 = vrcp.pop %v238
        %v270 = vmul.f32 %v206, %v269
        %v271 = vrcp.pop %v240
        %v272 = vmul.f32 %v208, %v271
        %v273 = vrcp.pop %v242
        %v274 = vmul.f32 %v210, %v273
        %v275 = vrcp.pop %v244
        %v276 = vmul.f32 %v212, %v275
        %v277 = vrcp.pop %v246
        %v278 = vmul.f32 %v214, %v277
        %v279 = vrcp.pop %v248
        %v280 = vmul.f32 %v216, %v279
        %v281 = vrcp.pop %v250
        %v282 = vmul.f32 %v218, %v281
        %v283 = vrcp.pop %v252
        %v284 = vmul.f32 %v220, %v283
        %v285 = vrcp.pop %v254
        %v286 = vmul.f32 %v222, %v285
        %v287 = vrcp.pop %v256
        %v288 = vmul.f32 %v224, %v287
        %v289 = vrcp.pop %v258
        %v290 = vmul.f32 %v226, %v289
        %v291 = vrcp.pop %v260
        %v292 = vmul.f32 %v228, %v291
        %v293 = vrcp.pop %v262
        %v294 = vmul.f32 %v230, %v293
        %v295 = vrcp.pop %v264
        %v296 = vmul.f32 %v232, %v295
        %v297 = vsub.f32 %v266, 0.1
        %v298 = vsub.f32 %v268, 0.1
        %v299 = vsub.f32 %v270, 0.1
        %v300 = vsub.f32 %v272, 0.1
        %v301 = vsub.f32 %v274, 0.1
        %v302 = vsub.f32 %v276, 0.1
        %v303 = vsub.f32 %v278, 0.1
        %v304 = vsub.f32 %v280, 0.1
        %v305 = vsub.f32 %v282, 0.1
        %v306 = vsub.f32 %v284, 0.1
        %v307 = vsub.f32 %v286, 0.1
        %v308 = vsub.f32 %v288, 0.1
        %v309 = vsub.f32 %v290, 0.1
        %v310 = vsub.f32 %v292, 0.1
        %v311 = vsub.f32 %v294, 0.1
        %v312 = vsub.f32 %v296, 0.1
        %v313 = vmax.f32 %v297, 0.0
        %v314 = vmax.f32 %v298, 0.0
        %v315 = vmax.f32 %v299, 0.0
        %v316 = vmax.f32 %v300, 0.0
        %v317 = vmax.f32 %v301, 0.0
        %v318 = vmax.f32 %v302, 0.0
        %v319 = vmax.f32 %v303, 0.0
        %v320 = vmax.f32 %v304, 0.0
        %v321 = vmax.f32 %v305, 0.0
        %v322 = vmax.f32 %v306, 0.0
        %v323 = vmax.f32 %v307, 0.0
        %v324 = vmax.f32 %v308, 0.0
        %v325 = vmax.f32 %v309, 0.0
        %v326 = vmax.f32 %v310, 0.0
        %v327 = vmax.f32 %v311, 0.0
        %v328 = vmax.f32 %v312, 0.0
        %329 = vst [vmem:[%s134] sm:$0xff] %v313
        %330 = vst [vmem:[%s134 + $0x8] sm:$0xff] %v314
        %331 = vst [vmem:[%s134 + $0x10] sm:$0xff] %v315
        %332 = vst [vmem:[%s134 + $0x18] sm:$0xff] %v316
        %333 = vst [vmem:[%s134 + $0x20] sm:$0xff] %v317
        %334 = vst [vmem:[%s134 + $0x28] sm:$0xff] %v318
        %335 = vst [vmem:[%s134 + $0x30] sm:$0xff] %v319
        %336 = vst [vmem:[%s134 + $0x38] sm:$0xff] %v320
        %337 = vst [vmem:[%s134 + $0x40] sm:$0xff] %v321
        %338 = vst [vmem:[%s134 + $0x48] sm:$0xff] %v322
        %339 = vst [vmem:[%s134 + $0x50] sm:$0xff] %v323
        %340 = vst [vmem:[%s134 + $0x58] sm:$0xff] %v324
        %341 = vst [vmem:[%s134 + $0x60] sm:$0xff] %v325
        %342 = vst [vmem:[%s134 + $0x68] sm:$0xff] %v326
        %343 = vst [vmem:[%s134 + $0x70] sm:$0xff] %v327
        %344 = vst [vmem:[%s134 + $0x78] sm:$0xff] %v328
        %s345 = sand.u32 %s52, 1
        %s346 = scalar_lea.sflag [#allocation4], %s345
        %s347 = sand.u32 %s52, 1
        %s348 = smul.addr %s347, 128
        %s349 = scalar_lea.vmem [#allocation5], %s348
        // Predicated region
        $region29: #{tpu_custom_call.1} parent=23 // pred_check
          %p350 = pneg %p62
        $region30: #{tpu_custom_call.1} parent=23 // pred_check_branch
          %352 = sbr.rel (%p350) target = $region32
        $region31: #{tpu_custom_call.1} parent=23 // pred_region
          %s353 = smul.u32 16, %s18
          %s355 = ssub.s32 2048, 2048
          %356 = vsyncadd %s346, %s355
          %s357 = smul.addr %s353, 128
          %s358 = scalar_lea.hbm %s1, %s357
          %s359 = sshll.u32 %s349, 4
          %s360 = int_to_ptr.vmem [resolvable:$true] %s359
          %365 = dma.vmem_to_hbm [thread:$0]  %s360, 2048, %s358, %s346, 128, 128, 8
        $region32: #{tpu_custom_call.1} parent=23 // pred_fallthru
          _
      $region24: #{tpu_custom_call.1} parent=5 // pred_fallthru
        _
      %p366 = scmp.le.s32.totalorder 2, %s13
      // Predicated region
      $region33: #{tpu_custom_call.1} parent=5 // pred_check
        %p367 = pneg %p366
      $region34: #{tpu_custom_call.1} parent=5 // pred_check_branch
        %369 = sbr.rel (%p367) target = $region36
      $region35: #{tpu_custom_call.1} parent=5 // pred_region
        %s370 = ssub.s32 %s13, 2
        // Predicated region
        $region37: #{tpu_custom_call.1} parent=35 // pred_check
          %p371 = pneg %p68
        $region38: #{tpu_custom_call.1} parent=35 // pred_check_branch
          %373 = sbr.rel (%p371) target = $region40
        $region39: #{tpu_custom_call.1} parent=35 // pred_region
          %s374 = sand.u32 %s53, 1
          %s375 = scalar_lea.sflag [#allocation4], %s374
          %s376 = sand.u32 %s53, 1
          %s377 = smul.addr %s376, 128
          %s378 = scalar_lea.vmem [#allocation5], %s377
          %379 = dma.done %s375, 2048
        $region40: #{tpu_custom_call.1} parent=35 // pred_fallthru
          _
      $region36: #{tpu_custom_call.1} parent=5 // pred_fallthru
        _
    $region6: #{tpu_custom_call.1} parent=1 // loop_footer
      %s17 = sadd.s32 1, %s13
    $region7: #{tpu_custom_call.1} parent=1 // loop_footer_branch
      %12 = sbr.rel target = $region3
    $region8: #{tpu_custom_call.1} parent=1 // loop_exit
      _
    %380 = vsyncpa [#allocation3], 1
    %s381 = scalar_lea.sflag [#allocation3], 1
    %382 = vsyncpa %s381, 1
    %383 = vsyncpa [#allocation4], 1
    %s384 = scalar_lea.sflag [#allocation4], 1
    %385 = vsyncpa %s384, 1

</llo_original>
